<compile_context>
chip_gen: v5e
topology: v5e:2x2
jax: 0.10.0
libtpu: 0.0.40
codegen_flags: <defaults>
</compile_context>

<pallas_src>
import functools

import jax
import jax.numpy as jnp
from jax import lax
from jax.experimental import pallas as pl
from jax.experimental.pallas import tpu as pltpu

_LANES = 128


def _normalize_kernel(x_ref, o_ref, *, power):
    """Generic path: reduce over the full last axis of the tile."""
    x = x_ref[...].astype(jnp.float32)
    if power == 2:
        s = jnp.sum(x * x, axis=-1, keepdims=True)
        inv = lax.rsqrt(s)
    else:
        s = jnp.sum(x ** power, axis=-1, keepdims=True)
        # s^(-1/power) via exp/log (general pow is EUP work either way).
        inv = jnp.exp(jnp.log(s) * (-1.0 / power))
    o_ref[...] = (x * inv).astype(o_ref.dtype)


def _normalize_packed_kernel(x_ref, seg_ref, o_ref, *, power):
    """Lane-dense path for D < 128: the tile is (tm, g*D) where each row holds
    g original rows back-to-back. The per-segment reduction (and its broadcast
    back across the segment's lanes) is a single MXU matmul against a
    block-diagonal ones matrix, so everything stays on full 128-lane vregs."""
    x = x_ref[...].astype(jnp.float32)
    xp = x * x if power == 2 else x ** power
    # s[i, j] = sum over the D-lane segment containing lane j of xp[i, :]
    s = jnp.dot(
        xp,
        seg_ref[...],
        preferred_element_type=jnp.float32,
        precision=lax.Precision.HIGHEST,  # keep the f32 reduction accurate
    )
    if power == 2:
        inv = lax.rsqrt(s)
    else:
        inv = jnp.exp(jnp.log(s) * (-1.0 / power))
    o_ref[...] = (x * inv).astype(o_ref.dtype)


def _round_up(n, m):
    return ((n + m - 1) // m) * m


def _choose_row_tile(n_rows, n_lanes, itemsize, block_budget_bytes):
    """Rows per block such that one block ~= budget; multiple of 8 sublanes.
    With input+output double-buffered, total VMEM ~= 4 * budget, which fits
    the smallest default scoped-VMEM limit (v5e: 16 MiB) at the 2 MiB default,
    and is comfortably inside v6e/v7x defaults as well."""
    tm = max(8, (block_budget_bytes // max(1, n_lanes * itemsize)) // 8 * 8)
    tm = min(tm, _round_up(n_rows, 8))  # never bigger than the (padded) array
    return tm


def normalize(x, power=2, *, block_budget_bytes=2 * 1024 * 1024):
    """x / x.pow(power).sum(-1, keepdim=True).pow(1/power) along the last axis."""
    orig_shape = x.shape
    orig_dtype = x.dtype
    D = orig_shape[-1]
    x2d = x.reshape(-1, D)
    N = x2d.shape[0]
    itemsize = jnp.dtype(orig_dtype).itemsize

    compiler_params = pltpu.CompilerParams(dimension_semantics=("parallel",))

    # ---- lane-dense packed path for small D (e.g. the GNN D=32 case) -------
    g = 1
    if D < _LANES and _LANES % D == 0:
        g_try = _LANES // D
        if N % g_try == 0:
            g = g_try

    if g > 1:
        Np, Dp = N // g, D * g  # Dp == 128
        xp = x2d.reshape(Np, Dp)  # free, contiguous reshape in HBM
        # Block-diagonal ones matrix: seg[i, j] = 1 iff i//D == j//D.
        idx = jnp.arange(Dp, dtype=jnp.int32) // D
        seg = (idx[:, None] == idx[None, :]).astype(jnp.float32)

        tm = _choose_row_tile(Np, Dp, itemsize, block_budget_bytes)
        grid = (pl.cdiv(Np, tm),)

        out = pl.pallas_call(
            functools.partial(_normalize_packed_kernel, power=power),
            out_shape=jax.ShapeDtypeStruct((Np, Dp), orig_dtype),
            grid_spec=pltpu.PrefetchScalarGridSpec(
                num_scalar_prefetch=0,
                grid=grid,
                in_specs=[
                    pl.BlockSpec((tm, Dp), lambda i: (i, 0)),
                    pl.BlockSpec((Dp, Dp), lambda i: (0, 0)),  # stays resident
                ],
                out_specs=pl.BlockSpec((tm, Dp), lambda i: (i, 0)),
            ),
            compiler_params=compiler_params,
        )(xp, seg)
        return out.reshape(orig_shape)

    # ---- generic path -------------------------------------------------------
    tm = _choose_row_tile(N, D, itemsize, block_budget_bytes)
    grid = (pl.cdiv(N, tm),)  # ragged last block is fine: reduction is per-row

    out = pl.pallas_call(
        functools.partial(_normalize_kernel, power=power),
        out_shape=jax.ShapeDtypeStruct((N, D), orig_dtype),
        grid_spec=pltpu.PrefetchScalarGridSpec(
            num_scalar_prefetch=0,
            grid=grid,
            in_specs=[pl.BlockSpec((tm, D), lambda i: (i, 0))],
            out_specs=pl.BlockSpec((tm, D), lambda i: (i, 0)),
        ),
        compiler_params=compiler_params,
    )(x2d)
    return out.reshape(orig_shape)


if __name__ == "__main__":
    key = jax.random.PRNGKey(0)
    k0, k1 = jax.random.split(key)

    # 1) GNN-style use: embedding vectors normalized along the last dim (D=32
    #    exercises the lane-dense packed path with the MXU segmented reduction).
    B, D = 8, 32
    x = jax.random.normal(k0, (B, D), dtype=jnp.float32)
    out = jax.block_until_ready(normalize(x, power=2))
    ref = x / jnp.power(jnp.sum(jnp.power(x, 2), axis=-1, keepdims=True), 0.5)
    assert jnp.allclose(out, ref, atol=1e-5, rtol=1e-4), "mismatch (packed path)"

    # 2) Generic path with a ragged row count and lane-aligned D.
    N2, D2 = 10, 128
    y = jax.random.normal(k1, (N2, D2), dtype=jnp.float32)
    out2 = jax.block_until_ready(normalize(y, power=2))
    ref2 = y / jnp.power(jnp.sum(jnp.power(y, 2), axis=-1, keepdims=True), 0.5)
    assert jnp.allclose(out2, ref2, atol=1e-5, rtol=1e-4), "mismatch (generic path)"

    print("KERNEL_OK")
</pallas_src>

<mosaic_0001>
module attributes {stable_mosaic.version = 11 : i64} {
  func.func @_normalize_packed_kernel(%arg0: i32, %arg1: memref<8x128xf32, #tpu.memory_space<vmem>>, %arg2: memref<128x128xf32, #tpu.memory_space<vmem>>, %arg3: memref<8x128xf32, #tpu.memory_space<vmem>>) attributes {dimension_semantics = [#tpu.dimension_semantics<parallel>], iteration_bounds = array<i64: 1>, scalar_prefetch = 0 : i64, scratch_operands = 0 : i64, tpu.core_type = #tpu.core_type<tc>, window_params = [{transform_indices = @transform_0, window_bounds = array<i64: 8, 128>}, {pipeline_mode = #tpu.pipeline_mode<synchronous>, transform_indices = @transform_1, window_bounds = array<i64: 128, 128>}, {transform_indices = @transform_2, window_bounds = array<i64: 8, 128>}]} {
    %c0 = arith.constant 0 : index
    %c0_0 = arith.constant 0 : index
    %0 = vector.load %arg1[%c0, %c0_0] : memref<8x128xf32, #tpu.memory_space<vmem>>, vector<8x128xf32>
    %1 = arith.mulf %0, %0 : vector<8x128xf32>
    %c0_1 = arith.constant 0 : index
    %c0_2 = arith.constant 0 : index
    %2 = vector.load %arg2[%c0_1, %c0_2] : memref<128x128xf32, #tpu.memory_space<vmem>>, vector<128x128xf32>
    %cst = arith.constant dense<0.000000e+00> : vector<8x128xf32>
    %3 = tpu.matmul %1, %2, %cst {dimension_numbers = #tpu.dot_dimension_numbers<[1], [0], [0], [1], [0, 0, 1, 1], [], []>, precision = #tpu.contract_precision<fp32>} : vector<8x128xf32>, vector<128x128xf32>, vector<8x128xf32> -> vector<8x128xf32>
    %4 = math.rsqrt %3 : vector<8x128xf32>
    %5 = arith.mulf %0, %4 : vector<8x128xf32>
    %c0_3 = arith.constant 0 : index
    %c0_4 = arith.constant 0 : index
    %6 = vector.load %arg3[%c0_3, %c0_4] : memref<8x128xf32, #tpu.memory_space<vmem>>, vector<8x128xf32>
    tpu.vector_store %arg3[%c0_3, %c0_4], %5 {strides = array<i32>} : memref<8x128xf32, #tpu.memory_space<vmem>>, vector<8x128xf32>,
    return
  }
  func.func @transform_0(%arg0: i32) -> (i32, i32) {
    %c0_i32 = arith.constant 0 : i32
    %c0_i32_0 = arith.constant 0 : i32
    return %arg0, %c0_i32 : i32, i32
  }
  func.func @transform_1(%arg0: i32) -> (i32, i32) {
    %c0_i32 = arith.constant 0 : i32
    %c0_i32_0 = arith.constant 0 : i32
    %c0_i32_1 = arith.constant 0 : i32
    return %c0_i32, %c0_i32_0 : i32, i32
  }
  func.func @transform_2(%arg0: i32) -> (i32, i32) {
    %c0_i32 = arith.constant 0 : i32
    %c0_i32_0 = arith.constant 0 : i32
    return %arg0, %c0_i32 : i32, i32
  }
}

</mosaic_0001>

<llo_original>
// kernel: tpu_custom_call.1
$region0: #{tpu_custom_call.1}
  #allocation0 [shape = 'u32[]', space=smem, size = 0x4, offset = 0x4, fixed_abs, tag = 'smem constant byte address 0x4 - core index']
  #allocation1 [shape = 'u32[72,128]{1,0:T(1,128)}', space=vmem, size = 0x9000, scoped, tag = 'internal scratch']
  %s0 = inlined_call_operand.hbm [shape: f32[2,128], index: 0, kind: input, shape index: {}]
  %s1 = inlined_call_operand.hbm [shape: f32[128,128], index: 1, kind: input, shape index: {}]
  %s2 = inlined_call_operand.hbm [shape: f32[2,128], index: 2, kind: output, shape index: {}]
  %s3 = sld [smem:[#allocation0]]
  $region26: #{tpu_custom_call.1} parent=0
    _
  %s5 = ssub.s32 1, %s3
  %s6 = scalar_select 0, %s5, %s3
  $region1: #{tpu_custom_call.1} parent=0
    #allocation2 [shape = 'u8[4096]{0}', space=vmem, size = 0x1000, scoped, tag = 'input window, operand 0, single buffered']
    #allocation3 [shape = 's32[1]{0}', space=sflag, size = 0x4, scoped, tag = 'scoped memory for tpu_custom_call.1']
    #allocation4 [shape = 's32[1]{0}', space=sflag, size = 0x4, scoped, tag = 'scoped memory for tpu_custom_call.1']
    #allocation5 [shape = 'u8[65536]{0}', space=vmem, size = 0x10000, scoped, tag = 'input window, operand 1, single buffered']
    #allocation6 [shape = 's32[1]{0}', space=sflag, size = 0x4, scoped, tag = 'scoped memory for tpu_custom_call.1']
    #allocation7 [shape = 'u8[4096]{0}', space=vmem, size = 0x1000, scoped, tag = 'output window, operand 0, single buffered']
    %7 = vsyncpa [#allocation3], 0
    %8 = vsyncpa [#allocation6], 0
    %9 = vsyncpa [#allocation4], 0
    // Predicated region
    $region2: #{tpu_custom_call.1} parent=1 // pred_check
      _
    $region3: #{tpu_custom_call.1} parent=1 // pred_check_branch
      %11 = sbr.rel (0) target = $region5
    $region4: #{tpu_custom_call.1} parent=1 // pred_region
      %13 = vsyncadd [#allocation3], 96
      %s14 = sshll.u32 %s0, 4
      %s15 = int_to_ptr.hbm [resolvable:$true] %s14
      %s16 = sshll.u32 [#allocation2], 4
      %s17 = int_to_ptr.vmem [resolvable:$true] %s16
      %22 = dma.hbm_to_vmem [thread:$0]  %s15, 32, %s17, [#allocation3], 32, 32, 2
    $region5: #{tpu_custom_call.1} parent=1 // pred_fallthru
      _
    // Predicated region
    $region6: #{tpu_custom_call.1} parent=1 // pred_check
      _
    $region7: #{tpu_custom_call.1} parent=1 // pred_check_branch
      %24 = sbr.rel (0) target = $region9
    $region8: #{tpu_custom_call.1} parent=1 // pred_region
      %26 = vsyncadd [#allocation6], 0
      %s27 = sshll.u32 %s1, 4
      %s28 = int_to_ptr.hbm [resolvable:$true] %s27
      %s29 = sshll.u32 [#allocation5], 4
      %s30 = int_to_ptr.vmem [resolvable:$true] %s29
      %35 = dma.hbm_to_vmem [thread:$0]  %s28, 2048, %s30, [#allocation6], 128, 128, 8
    $region9: #{tpu_custom_call.1} parent=1 // pred_fallthru
      _
    // Predicated region
    $region10: #{tpu_custom_call.1} parent=1 // pred_check
      _
    $region11: #{tpu_custom_call.1} parent=1 // pred_check_branch
      %37 = sbr.rel (0) target = $region13
    $region12: #{tpu_custom_call.1} parent=1 // pred_region
      %39 = dma.done [#allocation3], 128
    $region13: #{tpu_custom_call.1} parent=1 // pred_fallthru
      _
    // Predicated region
    $region14: #{tpu_custom_call.1} parent=1 // pred_check
      _
    $region15: #{tpu_custom_call.1} parent=1 // pred_check_branch
      %41 = sbr.rel (0) target = $region17
    $region16: #{tpu_custom_call.1} parent=1 // pred_region
      %43 = dma.done [#allocation6], 2048
    $region17: #{tpu_custom_call.1} parent=1 // pred_fallthru
      _
    %v44 = vld [vmem:[#allocation2] sm:$0xff]
    %v45 = vmul.f32 %v44, %v44
    %v46 = vld [vmem:[#allocation5] sm:$0xff]
    %v47 = vld [vmem:[#allocation5 + $0x8] sm:$0xff]
    %v48 = vld [vmem:[#allocation5 + $0x10] sm:$0xff]
    %v49 = vld [vmem:[#allocation5 + $0x18] sm:$0xff]
    %v50 = vld [vmem:[#allocation5 + $0x20] sm:$0xff]
    %v51 = vld [vmem:[#allocation5 + $0x28] sm:$0xff]
    %v52 = vld [vmem:[#allocation5 + $0x30] sm:$0xff]
    %v53 = vld [vmem:[#allocation5 + $0x38] sm:$0xff]
    %v54 = vld [vmem:[#allocation5 + $0x40] sm:$0xff]
    %v55 = vld [vmem:[#allocation5 + $0x48] sm:$0xff]
    %v56 = vld [vmem:[#allocation5 + $0x50] sm:$0xff]
    %v57 = vld [vmem:[#allocation5 + $0x58] sm:$0xff]
    %v58 = vld [vmem:[#allocation5 + $0x60] sm:$0xff]
    %v59 = vld [vmem:[#allocation5 + $0x68] sm:$0xff]
    %v60 = vld [vmem:[#allocation5 + $0x70] sm:$0xff]
    %v61 = vld [vmem:[#allocation5 + $0x78] sm:$0xff]
    %v62 = vand.u32 %v61, 4294901760
    %63 = vmatpush.msra.mxu0 %v62
    %v64 = vand.u32 %v60, 4294901760
    %65 = vmatpush.msra.mxu0 %v64
    %v66 = vand.u32 %v59, 4294901760
    %67 = vmatpush.msra.mxu0 %v66
    %v68 = vand.u32 %v58, 4294901760
    %69 = vmatpush.msra.mxu0 %v68
    %v70 = vand.u32 %v57, 4294901760
    %71 = vmatpush.msra.mxu0 %v70
    %v72 = vand.u32 %v56, 4294901760
    %73 = vmatpush.msra.mxu0 %v72
    %v74 = vand.u32 %v55, 4294901760
    %75 = vmatpush.msra.mxu0 %v74
    %v76 = vand.u32 %v54, 4294901760
    %77 = vmatpush.msra.mxu0 %v76
    %v78 = vand.u32 %v53, 4294901760
    %79 = vmatpush.msra.mxu0 %v78
    %v80 = vand.u32 %v52, 4294901760
    %81 = vmatpush.msra.mxu0 %v80
    %v82 = vand.u32 %v51, 4294901760
    %83 = vmatpush.msra.mxu0 %v82
    %v84 = vand.u32 %v50, 4294901760
    %85 = vmatpush.msra.mxu0 %v84
    %v86 = vand.u32 %v49, 4294901760
    %87 = vmatpush.msra.mxu0 %v86
    %v88 = vand.u32 %v48, 4294901760
    %89 = vmatpush.msra.mxu0 %v88
    %v90 = vand.u32 %v47, 4294901760
    %91 = vmatpush.msra.mxu0 %v90
    %v92 = vand.u32 %v46, 4294901760
    %93 = vmatpush.msra.mxu0 %v92
    %v94 = vand.u32 %v45, 4294901760
    %v95 = vsub.f32 %v45, %v94
    %v96 = vand.u32 %v95, 4294901760
    %v97 = vsub.f32 %v95, %v96
    %v98 = vand.u32 %v97, 4294901760
    %99 = vmatmul.f32.gmra.mxu0 %v98
    %v100 = vpop.f32.mrf.mxu0
    %v101 = vadd.f32 0.0, %v100
    %102 = vdwg.mxu0
    %v103 = vand.u32 %v61, 4294901760
    %v104 = vsub.f32 %v61, %v103
    %v105 = vand.u32 %v104, 4294901760
    %v106 = vsub.f32 %v104, %v105
    %v107 = vand.u32 %v106, 4294901760
    %108 = vmatpush.msra.mxu0 %v107
    %v109 = vand.u32 %v60, 4294901760
    %v110 = vsub.f32 %v60, %v109
    %v111 = vand.u32 %v110, 4294901760
    %v112 = vsub.f32 %v110, %v111
    %v113 = vand.u32 %v112, 4294901760
    %114 = vmatpush.msra.mxu0 %v113
    %v115 = vand.u32 %v59, 4294901760
    %v116 = vsub.f32 %v59, %v115
    %v117 = vand.u32 %v116, 4294901760
    %v118 = vsub.f32 %v116, %v117
    %v119 = vand.u32 %v118, 4294901760
    %120 = vmatpush.msra.mxu0 %v119
    %v121 = vand.u32 %v58, 4294901760
    %v122 = vsub.f32 %v58, %v121
    %v123 = vand.u32 %v122, 4294901760
    %v124 = vsub.f32 %v122, %v123
    %v125 = vand.u32 %v124, 4294901760
    %126 = vmatpush.msra.mxu0 %v125
    %v127 = vand.u32 %v57, 4294901760
    %v128 = vsub.f32 %v57, %v127
    %v129 = vand.u32 %v128, 4294901760
    %v130 = vsub.f32 %v128, %v129
    %v131 = vand.u32 %v130, 4294901760
    %132 = vmatpush.msra.mxu0 %v131
    %v133 = vand.u32 %v56, 4294901760
    %v134 = vsub.f32 %v56, %v133
    %v135 = vand.u32 %v134, 4294901760
    %v136 = vsub.f32 %v134, %v135
    %v137 = vand.u32 %v136, 4294901760
    %138 = vmatpush.msra.mxu0 %v137
    %v139 = vand.u32 %v55, 4294901760
    %v140 = vsub.f32 %v55, %v139
    %v141 = vand.u32 %v140, 4294901760
    %v142 = vsub.f32 %v140, %v141
    %v143 = vand.u32 %v142, 4294901760
    %144 = vmatpush.msra.mxu0 %v143
    %v145 = vand.u32 %v54, 4294901760
    %v146 = vsub.f32 %v54, %v145
    %v147 = vand.u32 %v146, 4294901760
    %v148 = vsub.f32 %v146, %v147
    %v149 = vand.u32 %v148, 4294901760
    %150 = vmatpush.msra.mxu0 %v149
    %v151 = vand.u32 %v53, 4294901760
    %v152 = vsub.f32 %v53, %v151
    %v153 = vand.u32 %v152, 4294901760
    %v154 = vsub.f32 %v152, %v153
    %v155 = vand.u32 %v154, 4294901760
    %156 = vmatpush.msra.mxu0 %v155
    %v157 = vand.u32 %v52, 4294901760
    %v158 = vsub.f32 %v52, %v157
    %v159 = vand.u32 %v158, 4294901760
    %v160 = vsub.f32 %v158, %v159
    %v161 = vand.u32 %v160, 4294901760
    %162 = vmatpush.msra.mxu0 %v161
    %v163 = vand.u32 %v51, 4294901760
    %v164 = vsub.f32 %v51, %v163
    %v165 = vand.u32 %v164, 4294901760
    %v166 = vsub.f32 %v164, %v165
    %v167 = vand.u32 %v166, 4294901760
    %168 = vmatpush.msra.mxu0 %v167
    %v169 = vand.u32 %v50, 4294901760
    %v170 = vsub.f32 %v50, %v169
    %v171 = vand.u32 %v170, 4294901760
    %v172 = vsub.f32 %v170, %v171
    %v173 = vand.u32 %v172, 4294901760
    %174 = vmatpush.msra.mxu0 %v173
    %v175 = vand.u32 %v49, 4294901760
    %v176 = vsub.f32 %v49, %v175
    %v177 = vand.u32 %v176, 4294901760
    %v178 = vsub.f32 %v176, %v177
    %v179 = vand.u32 %v178, 4294901760
    %180 = vmatpush.msra.mxu0 %v179
    %v181 = vand.u32 %v48, 4294901760
    %v182 = vsub.f32 %v48, %v181
    %v183 = vand.u32 %v182, 4294901760
    %v184 = vsub.f32 %v182, %v183
    %v185 = vand.u32 %v184, 4294901760
    %186 = vmatpush.msra.mxu0 %v185
    %v187 = vand.u32 %v47, 4294901760
    %v188 = vsub.f32 %v47, %v187
    %v189 = vand.u32 %v188, 4294901760
    %v190 = vsub.f32 %v188, %v189
    %v191 = vand.u32 %v190, 4294901760
    %192 = vmatpush.msra.mxu0 %v191
    %v193 = vand.u32 %v46, 4294901760
    %v194 = vsub.f32 %v46, %v193
    %v195 = vand.u32 %v194, 4294901760
    %v196 = vsub.f32 %v194, %v195
    %v197 = vand.u32 %v196, 4294901760
    %198 = vmatpush.msra.mxu0 %v197
    %v199 = vand.u32 %v45, 4294901760
    %200 = vmatmul.f32.gmra.mxu0 %v199
    %v201 = vpop.f32.mrf.mxu0
    %v202 = vadd.f32 %v101, %v201
    %203 = vdwg.mxu0
    %v204 = vand.u32 %v61, 4294901760
    %v205 = vsub.f32 %v61, %v204
    %206 = vmatpush.msra.mxu0 %v205
    %v207 = vand.u32 %v60, 4294901760
    %v208 = vsub.f32 %v60, %v207
    %209 = vmatpush.msra.mxu0 %v208
    %v210 = vand.u32 %v59, 4294901760
    %v211 = vsub.f32 %v59, %v210
    %212 = vmatpush.msra.mxu0 %v211
    %v213 = vand.u32 %v58, 4294901760
    %v214 = vsub.f32 %v58, %v213
    %215 = vmatpush.msra.mxu0 %v214
    %v216 = vand.u32 %v57, 4294901760
    %v217 = vsub.f32 %v57, %v216
    %218 = vmatpush.msra.mxu0 %v217
    %v219 = vand.u32 %v56, 4294901760
    %v220 = vsub.f32 %v56, %v219
    %221 = vmatpush.msra.mxu0 %v220
    %v222 = vand.u32 %v55, 4294901760
    %v223 = vsub.f32 %v55, %v222
    %224 = vmatpush.msra.mxu0 %v223
    %v225 = vand.u32 %v54, 4294901760
    %v226 = vsub.f32 %v54, %v225
    %227 = vmatpush.msra.mxu0 %v226
    %v228 = vand.u32 %v53, 4294901760
    %v229 = vsub.f32 %v53, %v228
    %230 = vmatpush.msra.mxu0 %v229
    %v231 = vand.u32 %v52, 4294901760
    %v232 = vsub.f32 %v52, %v231
    %233 = vmatpush.msra.mxu0 %v232
    %v234 = vand.u32 %v51, 4294901760
    %v235 = vsub.f32 %v51, %v234
    %236 = vmatpush.msra.mxu0 %v235
    %v237 = vand.u32 %v50, 4294901760
    %v238 = vsub.f32 %v50, %v237
    %239 = vmatpush.msra.mxu0 %v238
    %v240 = vand.u32 %v49, 4294901760
    %v241 = vsub.f32 %v49, %v240
    %242 = vmatpush.msra.mxu0 %v241
    %v243 = vand.u32 %v48, 4294901760
    %v244 = vsub.f32 %v48, %v243
    %245 = vmatpush.msra.mxu0 %v244
    %v246 = vand.u32 %v47, 4294901760
    %v247 = vsub.f32 %v47, %v246
    %248 = vmatpush.msra.mxu0 %v247
    %v249 = vand.u32 %v46, 4294901760
    %v250 = vsub.f32 %v46, %v249
    %251 = vmatpush.msra.mxu0 %v250
    %v252 = vand.u32 %v45, 4294901760
    %v253 = vsub.f32 %v45, %v252
    %254 = vmatmul.f32.gmra.mxu0 %v253
    %v255 = vpop.f32.mrf.mxu0
    %v256 = vadd.f32 %v202, %v255
    %257 = vdwg.mxu0
    %v258 = vand.u32 %v61, 4294901760
    %259 = vmatpush.msra.mxu0 %v258
    %v260 = vand.u32 %v60, 4294901760
    %261 = vmatpush.msra.mxu0 %v260
    %v262 = vand.u32 %v59, 4294901760
    %263 = vmatpush.msra.mxu0 %v262
    %v264 = vand.u32 %v58, 4294901760
    %265 = vmatpush.msra.mxu0 %v264
    %v266 = vand.u32 %v57, 4294901760
    %267 = vmatpush.msra.mxu0 %v266
    %v268 = vand.u32 %v56, 4294901760
    %269 = vmatpush.msra.mxu0 %v268
    %v270 = vand.u32 %v55, 4294901760
    %271 = vmatpush.msra.mxu0 %v270
    %v272 = vand.u32 %v54, 4294901760
    %273 = vmatpush.msra.mxu0 %v272
    %v274 = vand.u32 %v53, 4294901760
    %275 = vmatpush.msra.mxu0 %v274
    %v276 = vand.u32 %v52, 4294901760
    %277 = vmatpush.msra.mxu0 %v276
    %v278 = vand.u32 %v51, 4294901760
    %279 = vmatpush.msra.mxu0 %v278
    %v280 = vand.u32 %v50, 4294901760
    %281 = vmatpush.msra.mxu0 %v280
    %v282 = vand.u32 %v49, 4294901760
    %283 = vmatpush.msra.mxu0 %v282
    %v284 = vand.u32 %v48, 4294901760
    %285 = vmatpush.msra.mxu0 %v284
    %v286 = vand.u32 %v47, 4294901760
    %287 = vmatpush.msra.mxu0 %v286
    %v288 = vand.u32 %v46, 4294901760
    %289 = vmatpush.msra.mxu0 %v288
    %v290 = vand.u32 %v45, 4294901760
    %v291 = vsub.f32 %v45, %v290
    %v292 = vand.u32 %v291, 4294901760
    %293 = vmatmul.f32.gmra.mxu0 %v292
    %v294 = vpop.f32.mrf.mxu0
    %v295 = vadd.f32 %v256, %v294
    %296 = vdwg.mxu0
    %v297 = vand.u32 %v61, 4294901760
    %v298 = vsub.f32 %v61, %v297
    %v299 = vand.u32 %v298, 4294901760
    %300 = vmatpush.msra.mxu0 %v299
    %v301 = vand.u32 %v60, 4294901760
    %v302 = vsub.f32 %v60, %v301
    %v303 = vand.u32 %v302, 4294901760
    %304 = vmatpush.msra.mxu0 %v303
    %v305 = vand.u32 %v59, 4294901760
    %v306 = vsub.f32 %v59, %v305
    %v307 = vand.u32 %v306, 4294901760
    %308 = vmatpush.msra.mxu0 %v307
    %v309 = vand.u32 %v58, 4294901760
    %v310 = vsub.f32 %v58, %v309
    %v311 = vand.u32 %v310, 4294901760
    %312 = vmatpush.msra.mxu0 %v311
    %v313 = vand.u32 %v57, 4294901760
    %v314 = vsub.f32 %v57, %v313
    %v315 = vand.u32 %v314, 4294901760
    %316 = vmatpush.msra.mxu0 %v315
    %v317 = vand.u32 %v56, 4294901760
    %v318 = vsub.f32 %v56, %v317
    %v319 = vand.u32 %v318, 4294901760
    %320 = vmatpush.msra.mxu0 %v319
    %v321 = vand.u32 %v55, 4294901760
    %v322 = vsub.f32 %v55, %v321
    %v323 = vand.u32 %v322, 4294901760
    %324 = vmatpush.msra.mxu0 %v323
    %v325 = vand.u32 %v54, 4294901760
    %v326 = vsub.f32 %v54, %v325
    %v327 = vand.u32 %v326, 4294901760
    %328 = vmatpush.msra.mxu0 %v327
    %v329 = vand.u32 %v53, 4294901760
    %v330 = vsub.f32 %v53, %v329
    %v331 = vand.u32 %v330, 4294901760
    %332 = vmatpush.msra.mxu0 %v331
    %v333 = vand.u32 %v52, 4294901760
    %v334 = vsub.f32 %v52, %v333
    %v335 = vand.u32 %v334, 4294901760
    %336 = vmatpush.msra.mxu0 %v335
    %v337 = vand.u32 %v51, 4294901760
    %v338 = vsub.f32 %v51, %v337
    %v339 = vand.u32 %v338, 4294901760
    %340 = vmatpush.msra.mxu0 %v339
    %v341 = vand.u32 %v50, 4294901760
    %v342 = vsub.f32 %v50, %v341
    %v343 = vand.u32 %v342, 4294901760
    %344 = vmatpush.msra.mxu0 %v343
    %v345 = vand.u32 %v49, 4294901760
    %v346 = vsub.f32 %v49, %v345
    %v347 = vand.u32 %v346, 4294901760
    %348 = vmatpush.msra.mxu0 %v347
    %v349 = vand.u32 %v48, 4294901760
    %v350 = vsub.f32 %v48, %v349
    %v351 = vand.u32 %v350, 4294901760
    %352 = vmatpush.msra.mxu0 %v351
    %v353 = vand.u32 %v47, 4294901760
    %v354 = vsub.f32 %v47, %v353
    %v355 = vand.u32 %v354, 4294901760
    %356 = vmatpush.msra.mxu0 %v355
    %v357 = vand.u32 %v46, 4294901760
    %v358 = vsub.f32 %v46, %v357
    %v359 = vand.u32 %v358, 4294901760
    %360 = vmatpush.msra.mxu0 %v359
    %v361 = vand.u32 %v45, 4294901760
    %362 = vmatmul.f32.gmra.mxu0 %v361
    %v363 = vpop.f32.mrf.mxu0
    %v364 = vadd.f32 %v295, %v363
    %365 = vdwg.mxu0
    %v366 = vand.u32 %v61, 4294901760
    %367 = vmatpush.msra.mxu0 %v366
    %v368 = vand.u32 %v60, 4294901760
    %369 = vmatpush.msra.mxu0 %v368
    %v370 = vand.u32 %v59, 4294901760
    %371 = vmatpush.msra.mxu0 %v370
    %v372 = vand.u32 %v58, 4294901760
    %373 = vmatpush.msra.mxu0 %v372
    %v374 = vand.u32 %v57, 4294901760
    %375 = vmatpush.msra.mxu0 %v374
    %v376 = vand.u32 %v56, 4294901760
    %377 = vmatpush.msra.mxu0 %v376
    %v378 = vand.u32 %v55, 4294901760
    %379 = vmatpush.msra.mxu0 %v378
    %v380 = vand.u32 %v54, 4294901760
    %381 = vmatpush.msra.mxu0 %v380
    %v382 = vand.u32 %v53, 4294901760
    %383 = vmatpush.msra.mxu0 %v382
    %v384 = vand.u32 %v52, 4294901760
    %385 = vmatpush.msra.mxu0 %v384
    %v386 = vand.u32 %v51, 4294901760
    %387 = vmatpush.msra.mxu0 %v386
    %v388 = vand.u32 %v50, 4294901760
    %389 = vmatpush.msra.mxu0 %v388
    %v390 = vand.u32 %v49, 4294901760
    %391 = vmatpush.msra.mxu0 %v390
    %v392 = vand.u32 %v48, 4294901760
    %393 = vmatpush.msra.mxu0 %v392
    %v394 = vand.u32 %v47, 4294901760
    %395 = vmatpush.msra.mxu0 %v394
    %v396 = vand.u32 %v46, 4294901760
    %397 = vmatpush.msra.mxu0 %v396
    %v398 = vand.u32 %v45, 4294901760
    %399 = vmatmul.f32.gmra.mxu0 %v398
    %v400 = vpop.f32.mrf.mxu0
    %v401 = vadd.f32 %v364, %v400
    %402 = vdwg.mxu0
    %v403 = vrsqrt.pop %v401
    %v404 = vmul.f32 %v403, %v401
    %v405 = vmul.f32 %v404, %v403
    %v406 = vmul.f32 0.5, %v405
    %v407 = vsub.f32 1.5, %v406
    %v408 = vmul.f32 %v403, %v407
    %vm409 = vweird.f32 %v401
    %vm410 = vweird.f32 %v403
    %vm411 = vmor %vm409, %vm410
    %v412 = vsel %vm411, %v403, %v408
    %v413 = vmul.f32 %v44, %v412
    %414 = vst [vmem:[#allocation7] sm:$0xff] %v413
    // Predicated region
    $region18: #{tpu_custom_call.1} parent=1 // pred_check
      _
    $region19: #{tpu_custom_call.1} parent=1 // pred_check_branch
      %416 = sbr.rel (0) target = $region21
    $region20: #{tpu_custom_call.1} parent=1 // pred_region
      %418 = vsyncadd [#allocation4], 96
      %s419 = sshll.u32 [#allocation7], 4
      %s420 = int_to_ptr.vmem [resolvable:$true] %s419
      %s421 = sshll.u32 %s2, 4
      %s422 = int_to_ptr.hbm [resolvable:$true] %s421
      %427 = dma.vmem_to_hbm [thread:$0]  %s420, 32, %s422, [#allocation4], 32, 32, 2
    $region21: #{tpu_custom_call.1} parent=1 // pred_fallthru
      _
    // Predicated region
    $region22: #{tpu_custom_call.1} parent=1 // pred_check
      _
    $region23: #{tpu_custom_call.1} parent=1 // pred_check_branch
      %429 = sbr.rel (0) target = $region25
    $region24: #{tpu_custom_call.1} parent=1 // pred_region
      %431 = dma.done [#allocation4], 128
    $region25: #{tpu_custom_call.1} parent=1 // pred_fallthru
      _
    %432 = vsyncpa [#allocation3], 1
    %433 = vsyncpa [#allocation6], 1
    %434 = vsyncpa [#allocation4], 1

</llo_original>
